<compile_context>
chip_gen: v7x
topology: tpu7x:2x2x1
jax: 0.10.0
libtpu: 0.0.40
codegen_flags: <defaults>
</compile_context>

<pallas_src>
import jax
import jax.numpy as jnp
from jax.experimental import pallas as pl
from jax.experimental.pallas import tpu as pltpu


def _round_up(n, m):
    return ((n + m - 1) // m) * m


def mlp_kernel(x_ref, w1_ref, b1_ref, w2_ref, b2_ref, w3_ref, b3_ref, o_ref):
    # Layer 1: bf16 operands into the MXU, f32 accumulate, f32 epilogue.
    h = jnp.dot(x_ref[...].astype(jnp.bfloat16), w1_ref[...],
                preferred_element_type=jnp.float32)
    h = jnp.maximum(h + b1_ref[...], 0.0)
    # Layer 2.
    h = jnp.dot(h.astype(jnp.bfloat16), w2_ref[...],
                preferred_element_type=jnp.float32)
    h = jnp.maximum(h + b2_ref[...], 0.0)
    # Layer 3 (no activation); output block is lane-dense (padded to 128 lanes).
    h = jnp.dot(h.astype(jnp.bfloat16), w3_ref[...],
                preferred_element_type=jnp.float32)
    o_ref[...] = (h + b3_ref[...]).astype(o_ref.dtype)


def neural_net_forward(x, w1, b1, w2, b2, w3, b3, *, block_b=256):
    """x: (B, in). w*: (fan_in, fan_out) f32 (cast to bf16 here). b*: (1, fan_out) f32."""
    B, K = x.shape
    H = w1.shape[1]
    C = w3.shape[1]

    # Lane-dense output: pad last output dim to a multiple of 128.
    C_pad = _round_up(max(C, 128), 128)
    w3p = jnp.pad(w3, ((0, 0), (0, C_pad - C)))
    b3p = jnp.pad(b3, ((0, 0), (0, C_pad - C)))

    # Weights feed the MXU in bf16; biases stay f32 for the f32 epilogue.
    w1b = w1.astype(jnp.bfloat16)
    w2b = w2.astype(jnp.bfloat16)
    w3b = w3p.astype(jnp.bfloat16)

    # Batch tile: multiple of 8 (sublane), capped at block_b; pad batch to a
    # multiple of the tile so the grid covers it exactly.
    tb = min(block_b, _round_up(B, 8))
    B_pad = _round_up(B, tb)
    if B_pad != B:
        x = jnp.pad(x, ((0, B_pad - B), (0, 0)))
    grid = (B_pad // tb,)

    resident = lambda a: pl.BlockSpec(a.shape, lambda i: (0,) * a.ndim)

    out_padded = pl.pallas_call(
        mlp_kernel,
        out_shape=jax.ShapeDtypeStruct((B_pad, C_pad), jnp.float32),
        grid=grid,
        in_specs=[
            pl.BlockSpec((tb, K), lambda i: (i, 0)),   # x: batch-tiled
            resident(w1b), resident(b1),               # weights/biases: VMEM-resident
            resident(w2b), resident(b2),
            resident(w3b), resident(b3p),
        ],
        out_specs=pl.BlockSpec((tb, C_pad), lambda i: (i, 0)),
        compiler_params=pltpu.CompilerParams(
            dimension_semantics=("parallel",),
        ),
    )(x, w1b, b1, w2b, b2, w3b, b3p)

    return out_padded[:B, :C]


def init_params(key, input_size, hidden_size, num_classes):
    # Deterministic init mimicking nn.Linear's uniform(-1/sqrt(fan_in), 1/sqrt(fan_in)).
    ks = jax.random.split(key, 6)

    def lin(kw, kb, fan_in, fan_out):
        bound = 1.0 / jnp.sqrt(fan_in)
        w = jax.random.uniform(kw, (fan_in, fan_out), jnp.float32, -bound, bound)
        b = jax.random.uniform(kb, (1, fan_out), jnp.float32, -bound, bound)
        return w, b

    w1, b1 = lin(ks[0], ks[1], input_size, hidden_size)
    w2, b2 = lin(ks[2], ks[3], hidden_size, hidden_size)
    w3, b3 = lin(ks[4], ks[5], hidden_size, num_classes)
    return w1, b1, w2, b2, w3, b3


if __name__ == "__main__":
    key = jax.random.PRNGKey(0)
    # Batch large enough to exercise the batch-tiled grid (2 tiles of 256);
    # feature dims stay small, consistent with the module.
    batch, input_size, hidden_size, num_classes = 512, 32, 32, 16

    kx, kp = jax.random.split(key)
    x = jax.random.normal(kx, (batch, input_size), jnp.float32)
    w1, b1, w2, b2, w3, b3 = init_params(kp, input_size, hidden_size, num_classes)

    out = neural_net_forward(x, w1, b1, w2, b2, w3, b3)
    out = jax.block_until_ready(out)
    assert out.shape == (batch, num_classes)

    # Reference in plain JAX, mirroring the kernel's bf16-operand / f32-accumulate math.
    w1b, w2b, w3b = (w.astype(jnp.bfloat16) for w in (w1, w2, w3))
    h = jnp.maximum(
        jnp.dot(x.astype(jnp.bfloat16), w1b, preferred_element_type=jnp.float32) + b1, 0.0)
    h = jnp.maximum(
        jnp.dot(h.astype(jnp.bfloat16), w2b, preferred_element_type=jnp.float32) + b2, 0.0)
    ref = jnp.dot(h.astype(jnp.bfloat16), w3b, preferred_element_type=jnp.float32) + b3

    assert jnp.allclose(out, ref, atol=2e-2, rtol=2e-2), float(jnp.max(jnp.abs(out - ref)))

    print("KERNEL_OK")
</pallas_src>

<mosaic_0001>
module attributes {stable_mosaic.version = 11 : i64} {
  func.func @mlp_kernel(%arg0: i32, %arg1: memref<256x32xf32, #tpu.memory_space<vmem>>, %arg2: memref<32x32xbf16, #tpu.memory_space<vmem>>, %arg3: memref<1x32xf32, #tpu.memory_space<vmem>>, %arg4: memref<32x32xbf16, #tpu.memory_space<vmem>>, %arg5: memref<1x32xf32, #tpu.memory_space<vmem>>, %arg6: memref<32x128xbf16, #tpu.memory_space<vmem>>, %arg7: memref<1x128xf32, #tpu.memory_space<vmem>>, %arg8: memref<256x128xf32, #tpu.memory_space<vmem>>) attributes {dimension_semantics = [#tpu.dimension_semantics<parallel>], iteration_bounds = array<i64: 2>, scalar_prefetch = 0 : i64, scratch_operands = 0 : i64, tpu.core_type = #tpu.core_type<tc>, window_params = [{transform_indices = @transform_0, window_bounds = array<i64: 256, 32>}, {pipeline_mode = #tpu.pipeline_mode<synchronous>, transform_indices = @transform_1, window_bounds = array<i64: 32, 32>}, {pipeline_mode = #tpu.pipeline_mode<synchronous>, transform_indices = @transform_2, window_bounds = array<i64: 1, 32>}, {pipeline_mode = #tpu.pipeline_mode<synchronous>, transform_indices = @transform_3, window_bounds = array<i64: 32, 32>}, {pipeline_mode = #tpu.pipeline_mode<synchronous>, transform_indices = @transform_4, window_bounds = array<i64: 1, 32>}, {pipeline_mode = #tpu.pipeline_mode<synchronous>, transform_indices = @transform_5, window_bounds = array<i64: 32, 128>}, {pipeline_mode = #tpu.pipeline_mode<synchronous>, transform_indices = @transform_6, window_bounds = array<i64: 1, 128>}, {transform_indices = @transform_7, window_bounds = array<i64: 256, 128>}]} {
    %c0 = arith.constant 0 : index
    %c0_0 = arith.constant 0 : index
    %0 = vector.load %arg1[%c0, %c0_0] : memref<256x32xf32, #tpu.memory_space<vmem>>, vector<256x32xf32>
    %1 = arith.truncf %0 : vector<256x32xf32> to vector<256x32xbf16>
    %c0_1 = arith.constant 0 : index
    %c0_2 = arith.constant 0 : index
    %2 = vector.load %arg2[%c0_1, %c0_2] : memref<32x32xbf16, #tpu.memory_space<vmem>>, vector<32x32xbf16>
    %cst = arith.constant dense<0.000000e+00> : vector<256x32xf32>
    %3 = tpu.matmul %1, %2, %cst {dimension_numbers = #tpu.dot_dimension_numbers<[1], [0], [0], [1], [0, 0, 1, 1], [], []>} : vector<256x32xbf16>, vector<32x32xbf16>, vector<256x32xf32> -> vector<256x32xf32>
    %c0_3 = arith.constant 0 : index
    %c0_4 = arith.constant 0 : index
    %4 = vector.load %arg3[%c0_3, %c0_4] : memref<1x32xf32, #tpu.memory_space<vmem>>, vector<1x32xf32>
    %5 = vector.broadcast %4 : vector<1x32xf32> to vector<256x32xf32>
    %6 = arith.addf %3, %5 : vector<256x32xf32>
    %cst_5 = arith.constant 0.000000e+00 : f32
    %7 = vector.broadcast %cst_5 : f32 to vector<256x32xf32>
    %8 = arith.maximumf %6, %7 : vector<256x32xf32>
    %9 = arith.truncf %8 : vector<256x32xf32> to vector<256x32xbf16>
    %c0_6 = arith.constant 0 : index
    %c0_7 = arith.constant 0 : index
    %10 = vector.load %arg4[%c0_6, %c0_7] : memref<32x32xbf16, #tpu.memory_space<vmem>>, vector<32x32xbf16>
    %cst_8 = arith.constant dense<0.000000e+00> : vector<256x32xf32>
    %11 = tpu.matmul %9, %10, %cst_8 {dimension_numbers = #tpu.dot_dimension_numbers<[1], [0], [0], [1], [0, 0, 1, 1], [], []>} : vector<256x32xbf16>, vector<32x32xbf16>, vector<256x32xf32> -> vector<256x32xf32>
    %c0_9 = arith.constant 0 : index
    %c0_10 = arith.constant 0 : index
    %12 = vector.load %arg5[%c0_9, %c0_10] : memref<1x32xf32, #tpu.memory_space<vmem>>, vector<1x32xf32>
    %13 = vector.broadcast %12 : vector<1x32xf32> to vector<256x32xf32>
    %14 = arith.addf %11, %13 : vector<256x32xf32>
    %cst_11 = arith.constant 0.000000e+00 : f32
    %15 = vector.broadcast %cst_11 : f32 to vector<256x32xf32>
    %16 = arith.maximumf %14, %15 : vector<256x32xf32>
    %17 = arith.truncf %16 : vector<256x32xf32> to vector<256x32xbf16>
    %c0_12 = arith.constant 0 : index
    %c0_13 = arith.constant 0 : index
    %18 = vector.load %arg6[%c0_12, %c0_13] : memref<32x128xbf16, #tpu.memory_space<vmem>>, vector<32x128xbf16>
    %cst_14 = arith.constant dense<0.000000e+00> : vector<256x128xf32>
    %19 = tpu.matmul %17, %18, %cst_14 {dimension_numbers = #tpu.dot_dimension_numbers<[1], [0], [0], [1], [0, 0, 1, 1], [], []>} : vector<256x32xbf16>, vector<32x128xbf16>, vector<256x128xf32> -> vector<256x128xf32>
    %c0_15 = arith.constant 0 : index
    %c0_16 = arith.constant 0 : index
    %20 = vector.load %arg7[%c0_15, %c0_16] : memref<1x128xf32, #tpu.memory_space<vmem>>, vector<1x128xf32>
    %21 = vector.broadcast %20 : vector<1x128xf32> to vector<256x128xf32>
    %22 = arith.addf %19, %21 : vector<256x128xf32>
    %c0_17 = arith.constant 0 : index
    %c0_18 = arith.constant 0 : index
    %23 = vector.load %arg8[%c0_17, %c0_18] : memref<256x128xf32, #tpu.memory_space<vmem>>, vector<256x128xf32>
    tpu.vector_store %arg8[%c0_17, %c0_18], %22 {strides = array<i32>} : memref<256x128xf32, #tpu.memory_space<vmem>>, vector<256x128xf32>,
    return
  }
  func.func @transform_0(%arg0: i32) -> (i32, i32) {
    %c0_i32 = arith.constant 0 : i32
    %c0_i32_0 = arith.constant 0 : i32
    return %arg0, %c0_i32 : i32, i32
  }
  func.func @transform_1(%arg0: i32) -> (i32, i32) {
    %c0_i32 = arith.constant 0 : i32
    %c0_i32_0 = arith.constant 0 : i32
    %c0_i32_1 = arith.constant 0 : i32
    return %c0_i32, %c0_i32_0 : i32, i32
  }
  func.func @transform_2(%arg0: i32) -> (i32, i32) {
    %c0_i32 = arith.constant 0 : i32
    %c0_i32_0 = arith.constant 0 : i32
    %c0_i32_1 = arith.constant 0 : i32
    return %c0_i32, %c0_i32_0 : i32, i32
  }
  func.func @transform_3(%arg0: i32) -> (i32, i32) {
    %c0_i32 = arith.constant 0 : i32
    %c0_i32_0 = arith.constant 0 : i32
    %c0_i32_1 = arith.constant 0 : i32
    return %c0_i32, %c0_i32_0 : i32, i32
  }
  func.func @transform_4(%arg0: i32) -> (i32, i32) {
    %c0_i32 = arith.constant 0 : i32
    %c0_i32_0 = arith.constant 0 : i32
    %c0_i32_1 = arith.constant 0 : i32
    return %c0_i32, %c0_i32_0 : i32, i32
  }
  func.func @transform_5(%arg0: i32) -> (i32, i32) {
    %c0_i32 = arith.constant 0 : i32
    %c0_i32_0 = arith.constant 0 : i32
    %c0_i32_1 = arith.constant 0 : i32
    return %c0_i32, %c0_i32_0 : i32, i32
  }
  func.func @transform_6(%arg0: i32) -> (i32, i32) {
    %c0_i32 = arith.constant 0 : i32
    %c0_i32_0 = arith.constant 0 : i32
    %c0_i32_1 = arith.constant 0 : i32
    return %c0_i32, %c0_i32_0 : i32, i32
  }
  func.func @transform_7(%arg0: i32) -> (i32, i32) {
    %c0_i32 = arith.constant 0 : i32
    %c0_i32_0 = arith.constant 0 : i32
    return %arg0, %c0_i32 : i32, i32
  }
}

</mosaic_0001>

<llo_original>
// kernel: tpu_custom_call.1
$region0: #{tpu_custom_call.1}
  #allocation0 [shape = 'u32[]', space=smem, size = 0x4, offset = 0x4, fixed_abs, tag = 'smem constant byte address 0x4 - core index']
  #allocation1 [shape = 'u32[144,128]{1,0:T(1,128)}', space=vmem, size = 0x12000, scoped, tag = 'internal scratch']
  %s0 = inlined_call_operand.vmem [shape: f32[512,32], index: 0, kind: input, shape index: {}]
  %s1 = inlined_call_operand.vmem [shape: bf16[32,32], index: 1, kind: input, shape index: {}]
  %s2 = inlined_call_operand.vmem [shape: f32[1,32], index: 2, kind: input, shape index: {}]
  %s3 = inlined_call_operand.vmem [shape: bf16[32,32], index: 3, kind: input, shape index: {}]
  %s4 = inlined_call_operand.vmem [shape: f32[1,32], index: 4, kind: input, shape index: {}]
  %s5 = inlined_call_operand.vmem [shape: bf16[32,128], index: 5, kind: input, shape index: {}]
  %s6 = inlined_call_operand.vmem [shape: f32[1,128], index: 6, kind: input, shape index: {}]
  %s7 = inlined_call_operand.hbm [shape: f32[512,128], index: 7, kind: output, shape index: {}]
  %s8 = sld [smem:[#allocation0]]
  $region61: #{tpu_custom_call.1} parent=0
    _
  %s10 = ssub.s32 1, %s8
  %s11 = scalar_select 0, %s10, %s8
  $region1: #{tpu_custom_call.1} parent=0
    #allocation2 [shape = 'u8[262144]{0}', space=vmem, size = 0x40000, scoped, tag = 'output window, operand 0']
    #allocation3 [shape = 's32[2]{0}', space=sflag, size = 0x8, scoped, tag = 'scoped memory for tpu_custom_call.1']
    %12 = vsyncpa [#allocation3], 0
    %s13 = scalar_lea.sflag [#allocation3], 1
    %14 = vsyncpa %s13, 0
    loop: start=0, step=1, limit=4
    $region2: #{tpu_custom_call.1} parent=1 // loop_pre_header
      _
    $region3: #{tpu_custom_call.1} parent=1 // loop_header
      %s16 = sphi 0, %s20
      %p17 = scmp.ge.s32.totalorder %s16, 4
      %s26 = sphi 0, %s28
      %s29 = sphi 0, %s26
      %s30 = sphi 0, %s29
      %s46 = sphi 0, %s30
      %s50 = sphi 0, %s50
      %s52 = sphi 0, %s50
      %s53 = sphi 0, %s52
      %s67 = sphi 0, %s53
      %s71 = sphi 0, %s71
      %s73 = sphi 0, %s71
      %s74 = sphi 0, %s73
      %s88 = sphi 0, %s74
      %s92 = sphi 0, %s92
      %s94 = sphi 0, %s92
      %s95 = sphi 0, %s94
      %s109 = sphi 0, %s95
      %s113 = sphi 0, %s113
      %s115 = sphi 0, %s113
      %s116 = sphi 0, %s115
      %s130 = sphi 0, %s116
      %s134 = sphi 0, %s134
      %s136 = sphi 0, %s134
      %s137 = sphi 0, %s136
      %s151 = sphi 0, %s137
      %s155 = sphi 0, %s155
      %s157 = sphi 0, %s155
      %s158 = sphi 0, %s157
      %s172 = sphi 0, %s158
      %s178 = sphi 0, %s180
      %s181 = sphi 0, %s178
      %s182 = sphi 0, %s181
      %s198 = sphi 0, %s182
    $region4: #{tpu_custom_call.1} parent=1 // loop_header_branch
      %19 = sbr.rel (%p17) target = $region8
    $region5: #{tpu_custom_call.1} parent=1 // loop_body
      %s21 = ssub.s32 %s16, 1
      %s22 = ssub.s32 %s16, 2
      %s23 = sadd.s32 %s16, 1
      %s24 = ssub.s32 %s16, %s23
      %p25 = scmp.eq.s32.totalorder %s24, 0
      %s27 = sadd.s32 %s26, 1
      %s28 = scalar_select %p25, %s26, %s27
      %p31 = pneg %p25
      %p32 = scmp.eq.s32.totalorder %s16, 1
      %p33 = por %p31, %p32
      %p34 = scmp.ne.s32.totalorder %s26, %s29
      %p35 = scmp.eq.s32.totalorder %s16, 0
      %p36 = por %p34, %p35
      %p37 = scmp.ne.s32.totalorder %s26, %s29
      %p38 = scmp.eq.s32.totalorder %s21, 1
      %p39 = por %p37, %p38
      %p40 = scmp.ne.s32.totalorder %s29, %s30
      %p41 = scmp.eq.s32.totalorder %s21, 0
      %p42 = por %p40, %p41
      %p43 = scmp.ne.s32.totalorder %s29, %s30
      %p44 = scmp.eq.s32.totalorder %s22, 1
      %p45 = por %p43, %p44
      %p47 = scmp.ne.s32.totalorder %s30, %s46
      %p48 = scmp.eq.s32.totalorder %s22, 0
      %p49 = por %p47, %p48
      %s51 = sadd.s32 %s50, 1
      %p54 = scmp.eq.s32.totalorder %s16, 1
      %p55 = scmp.ne.s32.totalorder %s50, %s52
      %p56 = scmp.eq.s32.totalorder %s16, 0
      %p57 = por %p55, %p56
      %p58 = scmp.ne.s32.totalorder %s50, %s52
      %p59 = scmp.eq.s32.totalorder %s21, 1
      %p60 = por %p58, %p59
      %p61 = scmp.ne.s32.totalorder %s52, %s53
      %p62 = scmp.eq.s32.totalorder %s21, 0
      %p63 = por %p61, %p62
      %p64 = scmp.ne.s32.totalorder %s52, %s53
      %p65 = scmp.eq.s32.totalorder %s22, 1
      %p66 = por %p64, %p65
      %p68 = scmp.ne.s32.totalorder %s53, %s67
      %p69 = scmp.eq.s32.totalorder %s22, 0
      %p70 = por %p68, %p69
      %s72 = sadd.s32 %s71, 1
      %p75 = scmp.eq.s32.totalorder %s16, 1
      %p76 = scmp.ne.s32.totalorder %s71, %s73
      %p77 = scmp.eq.s32.totalorder %s16, 0
      %p78 = por %p76, %p77
      %p79 = scmp.ne.s32.totalorder %s71, %s73
      %p80 = scmp.eq.s32.totalorder %s21, 1
      %p81 = por %p79, %p80
      %p82 = scmp.ne.s32.totalorder %s73, %s74
      %p83 = scmp.eq.s32.totalorder %s21, 0
      %p84 = por %p82, %p83
      %p85 = scmp.ne.s32.totalorder %s73, %s74
      %p86 = scmp.eq.s32.totalorder %s22, 1
      %p87 = por %p85, %p86
      %p89 = scmp.ne.s32.totalorder %s74, %s88
      %p90 = scmp.eq.s32.totalorder %s22, 0
      %p91 = por %p89, %p90
      %s93 = sadd.s32 %s92, 1
      %p96 = scmp.eq.s32.totalorder %s16, 1
      %p97 = scmp.ne.s32.totalorder %s92, %s94
      %p98 = scmp.eq.s32.totalorder %s16, 0
      %p99 = por %p97, %p98
      %p100 = scmp.ne.s32.totalorder %s92, %s94
      %p101 = scmp.eq.s32.totalorder %s21, 1
      %p102 = por %p100, %p101
      %p103 = scmp.ne.s32.totalorder %s94, %s95
      %p104 = scmp.eq.s32.totalorder %s21, 0
      %p105 = por %p103, %p104
      %p106 = scmp.ne.s32.totalorder %s94, %s95
      %p107 = scmp.eq.s32.totalorder %s22, 1
      %p108 = por %p106, %p107
      %p110 = scmp.ne.s32.totalorder %s95, %s109
      %p111 = scmp.eq.s32.totalorder %s22, 0
      %p112 = por %p110, %p111
      %s114 = sadd.s32 %s113, 1
      %p117 = scmp.eq.s32.totalorder %s16, 1
      %p118 = scmp.ne.s32.totalorder %s113, %s115
      %p119 = scmp.eq.s32.totalorder %s16, 0
      %p120 = por %p118, %p119
      %p121 = scmp.ne.s32.totalorder %s113, %s115
      %p122 = scmp.eq.s32.totalorder %s21, 1
      %p123 = por %p121, %p122
      %p124 = scmp.ne.s32.totalorder %s115, %s116
      %p125 = scmp.eq.s32.totalorder %s21, 0
      %p126 = por %p124, %p125
      %p127 = scmp.ne.s32.totalorder %s115, %s116
      %p128 = scmp.eq.s32.totalorder %s22, 1
      %p129 = por %p127, %p128
      %p131 = scmp.ne.s32.totalorder %s116, %s130
      %p132 = scmp.eq.s32.totalorder %s22, 0
      %p133 = por %p131, %p132
      %s135 = sadd.s32 %s134, 1
      %p138 = scmp.eq.s32.totalorder %s16, 1
      %p139 = scmp.ne.s32.totalorder %s134, %s136
      %p140 = scmp.eq.s32.totalorder %s16, 0
      %p141 = por %p139, %p140
      %p142 = scmp.ne.s32.totalorder %s134, %s136
      %p143 = scmp.eq.s32.totalorder %s21, 1
      %p144 = por %p142, %p143
      %p145 = scmp.ne.s32.totalorder %s136, %s137
      %p146 = scmp.eq.s32.totalorder %s21, 0
      %p147 = por %p145, %p146
      %p148 = scmp.ne.s32.totalorder %s136, %s137
      %p149 = scmp.eq.s32.totalorder %s22, 1
      %p150 = por %p148, %p149
      %p152 = scmp.ne.s32.totalorder %s137, %s151
      %p153 = scmp.eq.s32.totalorder %s22, 0
      %p154 = por %p152, %p153
      %s156 = sadd.s32 %s155, 1
      %p159 = scmp.eq.s32.totalorder %s16, 1
      %p160 = scmp.ne.s32.totalorder %s155, %s157
      %p161 = scmp.eq.s32.totalorder %s16, 0
      %p162 = por %p160, %p161
      %p163 = scmp.ne.s32.totalorder %s155, %s157
      %p164 = scmp.eq.s32.totalorder %s21, 1
      %p165 = por %p163, %p164
      %p166 = scmp.ne.s32.totalorder %s157, %s158
      %p167 = scmp.eq.s32.totalorder %s21, 0
      %p168 = por %p166, %p167
      %p169 = scmp.ne.s32.totalorder %s157, %s158
      %p170 = scmp.eq.s32.totalorder %s22, 1
      %p171 = por %p169, %p170
      %p173 = scmp.ne.s32.totalorder %s158, %s172
      %p174 = scmp.eq.s32.totalorder %s22, 0
      %p175 = por %p173, %p174
      %s176 = ssub.s32 %s16, %s23
      %p177 = scmp.eq.s32.totalorder %s176, 0
      %s179 = sadd.s32 %s178, 1
      %s180 = scalar_select %p177, %s178, %s179
      %p183 = pneg %p177
      %p184 = scmp.eq.s32.totalorder %s16, 1
      %p185 = por %p183, %p184
      %p186 = scmp.ne.s32.totalorder %s178, %s181
      %p187 = scmp.eq.s32.totalorder %s16, 0
      %p188 = por %p186, %p187
      %p189 = scmp.ne.s32.totalorder %s178, %s181
      %p190 = scmp.eq.s32.totalorder %s21, 1
      %p191 = por %p189, %p190
      %p192 = scmp.ne.s32.totalorder %s181, %s182
      %p193 = scmp.eq.s32.totalorder %s21, 0
      %p194 = por %p192, %p193
      %p195 = scmp.ne.s32.totalorder %s181, %s182
      %p196 = scmp.eq.s32.totalorder %s22, 1
      %p197 = por %p195, %p196
      %p199 = scmp.ne.s32.totalorder %s182, %s198
      %p200 = scmp.eq.s32.totalorder %s22, 0
      %p201 = por %p199, %p200
      %p202 = scmp.le.s32.totalorder 1, %s16
      %p203 = scmp.lt.s32.totalorder %s16, 3
      %p204 = pnand %p202, %p203
      %p205 = pneg %p204
      // Predicated region
      $region9: #{tpu_custom_call.1} parent=5 // pred_check
        _
      $region10: #{tpu_custom_call.1} parent=5 // pred_check_branch
        %207 = sbr.rel (%p204) target = $region12
      $region11: #{tpu_custom_call.1} parent=5 // pred_region
        %s208 = ssub.s32 %s16, 1
        // Predicated region
        $region13: #{tpu_custom_call.1} parent=11 // pred_check
          %p209 = pneg %p63
        $region14: #{tpu_custom_call.1} parent=11 // pred_check_branch
          %211 = sbr.rel (%p209) target = $region16
        $region15: #{tpu_custom_call.1} parent=11 // pred_region
          _
        $region16: #{tpu_custom_call.1} parent=11 // pred_fallthru
          _
        // Predicated region
        $region17: #{tpu_custom_call.1} parent=11 // pred_check
          %p212 = pneg %p84
        $region18: #{tpu_custom_call.1} parent=11 // pred_check_branch
          %214 = sbr.rel (%p212) target = $region20
        $region19: #{tpu_custom_call.1} parent=11 // pred_region
          _
        $region20: #{tpu_custom_call.1} parent=11 // pred_fallthru
          _
        // Predicated region
        $region21: #{tpu_custom_call.1} parent=11 // pred_check
          %p215 = pneg %p105
        $region22: #{tpu_custom_call.1} parent=11 // pred_check_branch
          %217 = sbr.rel (%p215) target = $region24
        $region23: #{tpu_custom_call.1} parent=11 // pred_region
          _
        $region24: #{tpu_custom_call.1} parent=11 // pred_fallthru
          _
        // Predicated region
        $region25: #{tpu_custom_call.1} parent=11 // pred_check
          %p218 = pneg %p126
        $region26: #{tpu_custom_call.1} parent=11 // pred_check_branch
          %220 = sbr.rel (%p218) target = $region28
        $region27: #{tpu_custom_call.1} parent=11 // pred_region
          _
        $region28: #{tpu_custom_call.1} parent=11 // pred_fallthru
          _
        // Predicated region
        $region29: #{tpu_custom_call.1} parent=11 // pred_check
          %p221 = pneg %p147
        $region30: #{tpu_custom_call.1} parent=11 // pred_check_branch
          %223 = sbr.rel (%p221) target = $region32
        $region31: #{tpu_custom_call.1} parent=11 // pred_region
          _
        $region32: #{tpu_custom_call.1} parent=11 // pred_fallthru
          _
        // Predicated region
        $region33: #{tpu_custom_call.1} parent=11 // pred_check
          %p224 = pneg %p168
        $region34: #{tpu_custom_call.1} parent=11 // pred_check_branch
          %226 = sbr.rel (%p224) target = $region36
        $region35: #{tpu_custom_call.1} parent=11 // pred_region
          _
        $region36: #{tpu_custom_call.1} parent=11 // pred_fallthru
          _
      $region12: #{tpu_custom_call.1} parent=5 // pred_fallthru
        _
      %p227 = scmp.lt.s32.totalorder %s16, 2
      // Predicated region
      $region37: #{tpu_custom_call.1} parent=5 // pred_check
        %p228 = pneg %p227
      $region38: #{tpu_custom_call.1} parent=5 // pred_check_branch
        %230 = sbr.rel (%p228) target = $region40
      $region39: #{tpu_custom_call.1} parent=5 // pred_region
        // Predicated region
        $region41: #{tpu_custom_call.1} parent=39 // pred_check
          %p231 = pneg %p36
        $region42: #{tpu_custom_call.1} parent=39 // pred_check_branch
          %233 = sbr.rel (%p231) target = $region44
        $region43: #{tpu_custom_call.1} parent=39 // pred_region
          %s234 = smul.u32 32, %s16
          %p235 = scmp.lt.s32.totalorder %s234, 63
          %s236 = scalar_select %p235, %s234, 63
          %s237 = smul.addr %s236, 8
          %s238 = scalar_lea.vmem %s0, %s237
          %s239 = smul.u32 32, %s16
        $region44: #{tpu_custom_call.1} parent=39 // pred_fallthru
          _
      $region40: #{tpu_custom_call.1} parent=5 // pred_fallthru
        _
      %p240 = scmp.le.s32.totalorder 1, %s16
      %p241 = scmp.lt.s32.totalorder %s16, 3
      %p242 = pnand %p240, %p241
      %p243 = pneg %p242
      // Predicated region
      $region45: #{tpu_custom_call.1} parent=5 // pred_check
        _
      $region46: #{tpu_custom_call.1} parent=5 // pred_check_branch
        %245 = sbr.rel (%p242) target = $region48
      $region47: #{tpu_custom_call.1} parent=5 // pred_region
        %s246 = ssub.s32 %s16, 1
        %s247 = smul.u32 32, %s21
        %p248 = scmp.lt.s32.totalorder %s247, 63
        %s249 = scalar_select %p248, %s247, 63
        %s250 = smul.addr %s249, 8
        %s251 = scalar_lea.vmem %s0, %s250
        %p252 = pneg %p42
        %p253 = pneg %p39
        %p254 = pneg %p63
        %p255 = pneg %p60
        %p256 = pneg %p84
        %p257 = pneg %p81
        %p258 = pneg %p105
        %p259 = pneg %p102
        %p260 = pneg %p126
        %p261 = pneg %p123
        %p262 = pneg %p147
        %p263 = pneg %p144
        %p264 = pneg %p168
        %p265 = pneg %p165
        %p266 = pneg %p194
        %p267 = pneg %p191
        %s268 = sand.u32 %s181, 1
        %s269 = scalar_lea.sflag [#allocation3], %s268
        %s270 = sand.u32 %s181, 1
        %s271 = smul.addr %s270, 256
        %s272 = scalar_lea.vmem [#allocation2], %s271
        %s273 = smul.u32 32, %s21
        %p274 = scmp.lt.s32.totalorder %s273, 63
        %s275 = scalar_select %p274, %s273, 63
        %s276 = smul.addr %s275, 8
        %s277 = scalar_lea.vmem %s0, %s276
        %s278 = smul.u32 32, %s21
        %s279 = smul.u32 32, %s21
        %v281 = vld [vmem:[%s277] sm:$0xff]
        %v282 = vld [vmem:[%s277 + $0x8] sm:$0xff]
        %v283 = vld [vmem:[%s277 + $0x10] sm:$0xff]
        %v284 = vld [vmem:[%s277 + $0x18] sm:$0xff]
        %v285 = vld [vmem:[%s277 + $0x20] sm:$0xff]
        %v286 = vld [vmem:[%s277 + $0x28] sm:$0xff]
        %v287 = vld [vmem:[%s277 + $0x30] sm:$0xff]
        %v288 = vld [vmem:[%s277 + $0x38] sm:$0xff]
        %v289 = vld [vmem:[%s277 + $0x40] sm:$0xff]
        %v290 = vld [vmem:[%s277 + $0x48] sm:$0xff]
        %v291 = vld [vmem:[%s277 + $0x50] sm:$0xff]
        %v292 = vld [vmem:[%s277 + $0x58] sm:$0xff]
        %v293 = vld [vmem:[%s277 + $0x60] sm:$0xff]
        %v294 = vld [vmem:[%s277 + $0x68] sm:$0xff]
        %v295 = vld [vmem:[%s277 + $0x70] sm:$0xff]
        %v296 = vld [vmem:[%s277 + $0x78] sm:$0xff]
        %v297 = vld [vmem:[%s277 + $0x80] sm:$0xff]
        %v298 = vld [vmem:[%s277 + $0x88] sm:$0xff]
        %v299 = vld [vmem:[%s277 + $0x90] sm:$0xff]
        %v300 = vld [vmem:[%s277 + $0x98] sm:$0xff]
        %v301 = vld [vmem:[%s277 + $0xa0] sm:$0xff]
        %v302 = vld [vmem:[%s277 + $0xa8] sm:$0xff]
        %v303 = vld [vmem:[%s277 + $0xb0] sm:$0xff]
        %v304 = vld [vmem:[%s277 + $0xb8] sm:$0xff]
        %v305 = vld [vmem:[%s277 + $0xc0] sm:$0xff]
        %v306 = vld [vmem:[%s277 + $0xc8] sm:$0xff]
        %v307 = vld [vmem:[%s277 + $0xd0] sm:$0xff]
        %v308 = vld [vmem:[%s277 + $0xd8] sm:$0xff]
        %v309 = vld [vmem:[%s277 + $0xe0] sm:$0xff]
        %v310 = vld [vmem:[%s277 + $0xe8] sm:$0xff]
        %v311 = vld [vmem:[%s277 + $0xf0] sm:$0xff]
        %v312 = vld [vmem:[%s277 + $0xf8] sm:$0xff]
        %v313 = vpack.c.bf16 %v282, %v281
        %v314 = vpack.c.bf16 %v284, %v283
        %v315 = vpack.c.bf16 %v286, %v285
        %v316 = vpack.c.bf16 %v288, %v287
        %v317 = vpack.c.bf16 %v290, %v289
        %v318 = vpack.c.bf16 %v292, %v291
        %v319 = vpack.c.bf16 %v294, %v293
        %v320 = vpack.c.bf16 %v296, %v295
        %v321 = vpack.c.bf16 %v298, %v297
        %v322 = vpack.c.bf16 %v300, %v299
        %v323 = vpack.c.bf16 %v302, %v301
        %v324 = vpack.c.bf16 %v304, %v303
        %v325 = vpack.c.bf16 %v306, %v305
        %v326 = vpack.c.bf16 %v308, %v307
        %v327 = vpack.c.bf16 %v310, %v309
        %v328 = vpack.c.bf16 %v312, %v311
        %v329 = vld [vmem:[%s1] sm:$0xf]
        %v330 = vld [vmem:[%s1 + $0x4] sm:$0xf]
        %v331 = vld [vmem:[%s1 + $0x8] sm:$0xf]
        %v332 = vld [vmem:[%s1 + $0xc] sm:$0xf]
        %v333 = vld [vmem:[%s2] sm:$0x1]
        %v335 = vlaneseq
        %v336 = vshrl.u32 %v335, 7
        %v337 = vsub.s32 0, %v336
        %v338 = vrot.slane %v333, %v337
        %v344 = vunpack.c.l.b16 %v329
        %v345 = vunpack.c.l.b16 %v330
        %v346 = vunpack.c.l.b16 %v331
        %v347 = vunpack.c.l.b16 %v332
        %v348 = vpack.c.b16 %v345, %v344
        %v349 = vpack.c.b16 %v347, %v346
        %vm352 = vcmask 261120
        %v354 = vsel %vm352, %v313, 0
        %v357 = vsel %vm352, %v314, 0
        %v360 = vsel %vm352, %v315, 0
        %v363 = vsel %vm352, %v316, 0
        %v366 = vsel %vm352, %v317, 0
        %v369 = vsel %vm352, %v318, 0
        %v372 = vsel %vm352, %v319, 0
        %v375 = vsel %vm352, %v320, 0
        %v378 = vsel %vm352, %v321, 0
        %v381 = vsel %vm352, %v322, 0
        %v384 = vsel %vm352, %v323, 0
        %v387 = vsel %vm352, %v324, 0
        %v390 = vsel %vm352, %v325, 0
        %v393 = vsel %vm352, %v326, 0
        %v396 = vsel %vm352, %v327, 0
        %v399 = vsel %vm352, %v328, 0
        %401 = vmatprep.subr.bf16.mxu0 0
        %402 = vmatpush1.bf16.msra.mxu0 %v348
        %403 = vmatprep.subr.bf16.mxu0 0
        %404 = vmatpush1.bf16.msra.mxu0 %v349
        %405 = vmatprep.subr.bf16.mxu0 0
        %406 = vmatpush1.bf16.msra.mxu0 0
        %407 = vmatprep.subr.bf16.mxu0 0
        %408 = vmatpush1.bf16.msra.mxu0 0
        %409 = vmatprep.subr.bf16.mxu0 0
        %410 = vmatpush1.bf16.msra.mxu0 0
        %411 = vmatprep.subr.bf16.mxu0 0
        %412 = vmatpush1.bf16.msra.mxu0 0
        %413 = vmatprep.subr.bf16.mxu0 0
        %414 = vmatpush1.bf16.msra.mxu0 0
        %415 = vmatprep.subr.bf16.mxu0 0
        %416 = vmatpush1.bf16.msra.mxu0 0
        %417 = vmatprep.subr.bf16.mxu0 0
        %418 = vmatpush1.bf16.msra.mxu0 0
        %419 = vmatprep.subr.bf16.mxu0 0
        %420 = vmatpush1.bf16.msra.mxu0 0
        %421 = vmatprep.subr.bf16.mxu0 0
        %422 = vmatpush1.bf16.msra.mxu0 0
        %423 = vmatprep.subr.bf16.mxu0 0
        %424 = vmatpush1.bf16.msra.mxu0 0
        %425 = vmatprep.subr.bf16.mxu0 0
        %426 = vmatpush1.bf16.msra.mxu0 0
        %427 = vmatprep.subr.bf16.mxu0 0
        %428 = vmatpush1.bf16.msra.mxu0 0
        %429 = vmatprep.subr.bf16.mxu0 0
        %430 = vmatpush1.bf16.msra.mxu0 0
        %431 = vmatprep.subr.bf16.mxu0 0
        %432 = vmatpush1.bf16.msra.mxu0 0
        %433 = vmatprep.mubr.bf16.mxu0 0
        %434 = vmatmul.mubr.bf16.gmra.mrb[0].mxu0 %v354
        %v435 = vpop.f32.mrb[0].mxu0
        %v436 = vadd.f32 %v338, %v435
        %v437 = vpop.f32.mrb[0].mxu0
        %v438 = vpop.f32.mrb[0].mxu0
        %v439 = vadd.f32 %v338, %v438
        %v440 = vpop.f32.mrb[0].mxu0
        %441 = vmatprep.mubr.bf16.mxu0 0
        %442 = vmatmul.mubr.bf16.gmra.mrb[0].mxu0 %v357
        %v443 = vpop.f32.mrb[0].mxu0
        %v444 = vadd.f32 %v338, %v443
        %v445 = vpop.f32.mrb[0].mxu0
        %v446 = vpop.f32.mrb[0].mxu0
        %v447 = vadd.f32 %v338, %v446
        %v448 = vpop.f32.mrb[0].mxu0
        %449 = vmatprep.mubr.bf16.mxu0 0
        %450 = vmatmul.mubr.bf16.gmra.mrb[0].mxu0 %v360
        %v451 = vpop.f32.mrb[0].mxu0
        %v452 = vadd.f32 %v338, %v451
        %v453 = vpop.f32.mrb[0].mxu0
        %v454 = vpop.f32.mrb[0].mxu0
        %v455 = vadd.f32 %v338, %v454
        %v456 = vpop.f32.mrb[0].mxu0
        %457 = vmatprep.mubr.bf16.mxu0 0
        %458 = vmatmul.mubr.bf16.gmra.mrb[0].mxu0 %v363
        %v459 = vpop.f32.mrb[0].mxu0
        %v460 = vadd.f32 %v338, %v459
        %v461 = vpop.f32.mrb[0].mxu0
        %v462 = vpop.f32.mrb[0].mxu0
        %v463 = vadd.f32 %v338, %v462
        %v464 = vpop.f32.mrb[0].mxu0
        %465 = vmatprep.mubr.bf16.mxu0 0
        %466 = vmatmul.mubr.bf16.gmra.mrb[0].mxu0 %v366
        %v467 = vpop.f32.mrb[0].mxu0
        %v468 = vadd.f32 %v338, %v467
        %v469 = vpop.f32.mrb[0].mxu0
        %v470 = vpop.f32.mrb[0].mxu0
        %v471 = vadd.f32 %v338, %v470
        %v472 = vpop.f32.mrb[0].mxu0
        %473 = vmatprep.mubr.bf16.mxu0 0
        %474 = vmatmul.mubr.bf16.gmra.mrb[0].mxu0 %v369
        %v475 = vpop.f32.mrb[0].mxu0
        %v476 = vadd.f32 %v338, %v475
        %v477 = vpop.f32.mrb[0].mxu0
        %v478 = vpop.f32.mrb[0].mxu0
        %v479 = vadd.f32 %v338, %v478
        %v480 = vpop.f32.mrb[0].mxu0
        %481 = vmatprep.mubr.bf16.mxu0 0
        %482 = vmatmul.mubr.bf16.gmra.mrb[0].mxu0 %v372
        %v483 = vpop.f32.mrb[0].mxu0
        %v484 = vadd.f32 %v338, %v483
        %v485 = vpop.f32.mrb[0].mxu0
        %v486 = vpop.f32.mrb[0].mxu0
        %v487 = vadd.f32 %v338, %v486
        %v488 = vpop.f32.mrb[0].mxu0
        %489 = vmatprep.mubr.bf16.mxu0 0
        %490 = vmatmul.mubr.bf16.gmra.mrb[0].mxu0 %v375
        %v491 = vpop.f32.mrb[0].mxu0
        %v492 = vadd.f32 %v338, %v491
        %v493 = vpop.f32.mrb[0].mxu0
        %v494 = vpop.f32.mrb[0].mxu0
        %v495 = vadd.f32 %v338, %v494
        %v496 = vpop.f32.mrb[0].mxu0
        %497 = vmatprep.mubr.bf16.mxu0 0
        %498 = vmatmul.mubr.bf16.gmra.mrb[0].mxu0 %v378
        %v499 = vpop.f32.mrb[0].mxu0
        %v500 = vadd.f32 %v338, %v499
        %v501 = vpop.f32.mrb[0].mxu0
        %v502 = vpop.f32.mrb[0].mxu0
        %v503 = vadd.f32 %v338, %v502
        %v504 = vpop.f32.mrb[0].mxu0
        %505 = vmatprep.mubr.bf16.mxu0 0
        %506 = vmatmul.mubr.bf16.gmra.mrb[0].mxu0 %v381
        %v507 = vpop.f32.mrb[0].mxu0
        %v508 = vadd.f32 %v338, %v507
        %v509 = vpop.f32.mrb[0].mxu0
        %v510 = vpop.f32.mrb[0].mxu0
        %v511 = vadd.f32 %v338, %v510
        %v512 = vpop.f32.mrb[0].mxu0
        %513 = vmatprep.mubr.bf16.mxu0 0
        %514 = vmatmul.mubr.bf16.gmra.mrb[0].mxu0 %v384
        %v515 = vpop.f32.mrb[0].mxu0
        %v516 = vadd.f32 %v338, %v515
        %v517 = vpop.f32.mrb[0].mxu0
        %v518 = vpop.f32.mrb[0].mxu0
        %v519 = vadd.f32 %v338, %v518
        %v520 = vpop.f32.mrb[0].mxu0
        %521 = vmatprep.mubr.bf16.mxu0 0
        %522 = vmatmul.mubr.bf16.gmra.mrb[0].mxu0 %v387
        %v523 = vpop.f32.mrb[0].mxu0
        %v524 = vadd.f32 %v338, %v523
        %v525 = vpop.f32.mrb[0].mxu0
        %v526 = vpop.f32.mrb[0].mxu0
        %v527 = vadd.f32 %v338, %v526
        %v528 = vpop.f32.mrb[0].mxu0
        %529 = vmatprep.mubr.bf16.mxu0 0
        %530 = vmatmul.mubr.bf16.gmra.mrb[0].mxu0 %v390
        %v531 = vpop.f32.mrb[0].mxu0
        %v532 = vadd.f32 %v338, %v531
        %v533 = vpop.f32.mrb[0].mxu0
        %v534 = vpop.f32.mrb[0].mxu0
        %v535 = vadd.f32 %v338, %v534
        %v536 = vpop.f32.mrb[0].mxu0
        %537 = vmatprep.mubr.bf16.mxu0 0
        %538 = vmatmul.mubr.bf16.gmra.mrb[0].mxu0 %v393
        %v539 = vpop.f32.mrb[0].mxu0
        %v540 = vadd.f32 %v338, %v539
        %v541 = vpop.f32.mrb[0].mxu0
        %v542 = vpop.f32.mrb[0].mxu0
        %v543 = vadd.f32 %v338, %v542
        %v544 = vpop.f32.mrb[0].mxu0
        %545 = vmatprep.mubr.bf16.mxu0 0
        %546 = vmatmul.mubr.bf16.gmra.mrb[0].mxu0 %v396
        %v547 = vpop.f32.mrb[0].mxu0
        %v548 = vadd.f32 %v338, %v547
        %v549 = vpop.f32.mrb[0].mxu0
        %v550 = vpop.f32.mrb[0].mxu0
        %v551 = vadd.f32 %v338, %v550
        %v552 = vpop.f32.mrb[0].mxu0
        %553 = vmatprep.mubr.bf16.mxu0 0
        %554 = vmatmul.mubr.bf16.gmra.mrb[0].mxu0 %v399
        %v555 = vpop.f32.mrb[0].mxu0
        %v556 = vadd.f32 %v338, %v555
        %v557 = vpop.f32.mrb[0].mxu0
        %v558 = vpop.f32.mrb[0].mxu0
        %v559 = vadd.f32 %v338, %v558
        %v560 = vpop.f32.mrb[0].mxu0
        %561 = vdwg.mxu0
        %v562 = vmax.f32 %v436, 0.0
        %v563 = vmax.f32 %v439, 0.0
        %v564 = vmax.f32 %v444, 0.0
        %v565 = vmax.f32 %v447, 0.0
        %v566 = vmax.f32 %v452, 0.0
        %v567 = vmax.f32 %v455, 0.0
        %v568 = vmax.f32 %v460, 0.0
        %v569 = vmax.f32 %v463, 0.0
        %v570 = vmax.f32 %v468, 0.0
        %v571 = vmax.f32 %v471, 0.0
        %v572 = vmax.f32 %v476, 0.0
        %v573 = vmax.f32 %v479, 0.0
        %v574 = vmax.f32 %v484, 0.0
        %v575 = vmax.f32 %v487, 0.0
        %v576 = vmax.f32 %v492, 0.0
        %v577 = vmax.f32 %v495, 0.0
        %v578 = vmax.f32 %v500, 0.0
        %v579 = vmax.f32 %v503, 0.0
        %v580 = vmax.f32 %v508, 0.0
        %v581 = vmax.f32 %v511, 0.0
        %v582 = vmax.f32 %v516, 0.0
        %v583 = vmax.f32 %v519, 0.0
        %v584 = vmax.f32 %v524, 0.0
        %v585 = vmax.f32 %v527, 0.0
        %v586 = vmax.f32 %v532, 0.0
        %v587 = vmax.f32 %v535, 0.0
        %v588 = vmax.f32 %v540, 0.0
        %v589 = vmax.f32 %v543, 0.0
        %v590 = vmax.f32 %v548, 0.0
        %v591 = vmax.f32 %v551, 0.0
        %v592 = vmax.f32 %v556, 0.0
        %v593 = vmax.f32 %v559, 0.0
        %v594 = vpack.c.bf16 %v563, %v562
        %v595 = vpack.c.bf16 %v565, %v564
        %v596 = vpack.c.bf16 %v567, %v566
        %v597 = vpack.c.bf16 %v569, %v568
        %v598 = vpack.c.bf16 %v571, %v570
        %v599 = vpack.c.bf16 %v573, %v572
        %v600 = vpack.c.bf16 %v575, %v574
        %v601 = vpack.c.bf16 %v577, %v576
        %v602 = vpack.c.bf16 %v579, %v578
        %v603 = vpack.c.bf16 %v581, %v580
        %v604 = vpack.c.bf16 %v583, %v582
        %v605 = vpack.c.bf16 %v585, %v584
        %v606 = vpack.c.bf16 %v587, %v586
        %v607 = vpack.c.bf16 %v589, %v588
        %v608 = vpack.c.bf16 %v591, %v590
        %v609 = vpack.c.bf16 %v593, %v592
        %v610 = vld [vmem:[%s3] sm:$0xf]
        %v611 = vld [vmem:[%s3 + $0x4] sm:$0xf]
        %v612 = vld [vmem:[%s3 + $0x8] sm:$0xf]
        %v613 = vld [vmem:[%s3 + $0xc] sm:$0xf]
        %v614 = vld [vmem:[%s4] sm:$0x1]
        %v616 = vlaneseq
        %v617 = vshrl.u32 %v616, 7
        %v618 = vsub.s32 0, %v617
        %v619 = vrot.slane %v614, %v618
        %v625 = vunpack.c.l.b16 %v610
        %v626 = vunpack.c.l.b16 %v611
        %v627 = vunpack.c.l.b16 %v612
        %v628 = vunpack.c.l.b16 %v613
        %v629 = vpack.c.b16 %v626, %v625
        %v630 = vpack.c.b16 %v628, %v627
        %v634 = vsel %vm352, %v594, 0
        %v637 = vsel %vm352, %v595, 0
        %v640 = vsel %vm352, %v596, 0
        %v643 = vsel %vm352, %v597, 0
        %v646 = vsel %vm352, %v598, 0
        %v649 = vsel %vm352, %v599, 0
        %v652 = vsel %vm352, %v600, 0
        %v655 = vsel %vm352, %v601, 0
        %v658 = vsel %vm352, %v602, 0
        %v661 = vsel %vm352, %v603, 0
        %v664 = vsel %vm352, %v604, 0
        %v667 = vsel %vm352, %v605, 0
        %v670 = vsel %vm352, %v606, 0
        %v673 = vsel %vm352, %v607, 0
        %v676 = vsel %vm352, %v608, 0
        %v679 = vsel %vm352, %v609, 0
        %681 = vmatprep.subr.bf16.mxu0 0
        %682 = vmatpush1.bf16.msra.mxu0 %v629
        %683 = vmatprep.subr.bf16.mxu0 0
        %684 = vmatpush1.bf16.msra.mxu0 %v630
        %685 = vmatprep.subr.bf16.mxu0 0
        %686 = vmatpush1.bf16.msra.mxu0 0
        %687 = vmatprep.subr.bf16.mxu0 0
        %688 = vmatpush1.bf16.msra.mxu0 0
        %689 = vmatprep.subr.bf16.mxu0 0
        %690 = vmatpush1.bf16.msra.mxu0 0
        %691 = vmatprep.subr.bf16.mxu0 0
        %692 = vmatpush1.bf16.msra.mxu0 0
        %693 = vmatprep.subr.bf16.mxu0 0
        %694 = vmatpush1.bf16.msra.mxu0 0
        %695 = vmatprep.subr.bf16.mxu0 0
        %696 = vmatpush1.bf16.msra.mxu0 0
        %697 = vmatprep.subr.bf16.mxu0 0
        %698 = vmatpush1.bf16.msra.mxu0 0
        %699 = vmatprep.subr.bf16.mxu0 0
        %700 = vmatpush1.bf16.msra.mxu0 0
        %701 = vmatprep.subr.bf16.mxu0 0
        %702 = vmatpush1.bf16.msra.mxu0 0
        %703 = vmatprep.subr.bf16.mxu0 0
        %704 = vmatpush1.bf16.msra.mxu0 0
        %705 = vmatprep.subr.bf16.mxu0 0
        %706 = vmatpush1.bf16.msra.mxu0 0
        %707 = vmatprep.subr.bf16.mxu0 0
        %708 = vmatpush1.bf16.msra.mxu0 0
        %709 = vmatprep.subr.bf16.mxu0 0
        %710 = vmatpush1.bf16.msra.mxu0 0
        %711 = vmatprep.subr.bf16.mxu0 0
        %712 = vmatpush1.bf16.msra.mxu0 0
        %713 = vmatprep.mubr.bf16.mxu0 0
        %714 = vmatmul.mubr.bf16.gmra.mrb[0].mxu0 %v634
        %v715 = vpop.f32.mrb[0].mxu0
        %v716 = vadd.f32 %v619, %v715
        %v717 = vpop.f32.mrb[0].mxu0
        %v718 = vpop.f32.mrb[0].mxu0
        %v719 = vadd.f32 %v619, %v718
        %v720 = vpop.f32.mrb[0].mxu0
        %721 = vmatprep.mubr.bf16.mxu0 0
        %722 = vmatmul.mubr.bf16.gmra.mrb[0].mxu0 %v637
        %v723 = vpop.f32.mrb[0].mxu0
        %v724 = vadd.f32 %v619, %v723
        %v725 = vpop.f32.mrb[0].mxu0
        %v726 = vpop.f32.mrb[0].mxu0
        %v727 = vadd.f32 %v619, %v726
        %v728 = vpop.f32.mrb[0].mxu0
        %729 = vmatprep.mubr.bf16.mxu0 0
        %730 = vmatmul.mubr.bf16.gmra.mrb[0].mxu0 %v640
        %v731 = vpop.f32.mrb[0].mxu0
        %v732 = vadd.f32 %v619, %v731
        %v733 = vpop.f32.mrb[0].mxu0
        %v734 = vpop.f32.mrb[0].mxu0
        %v735 = vadd.f32 %v619, %v734
        %v736 = vpop.f32.mrb[0].mxu0
        %737 = vmatprep.mubr.bf16.mxu0 0
        %738 = vmatmul.mubr.bf16.gmra.mrb[0].mxu0 %v643
        %v739 = vpop.f32.mrb[0].mxu0
        %v740 = vadd.f32 %v619, %v739
        %v741 = vpop.f32.mrb[0].mxu0
        %v742 = vpop.f32.mrb[0].mxu0
        %v743 = vadd.f32 %v619, %v742
        %v744 = vpop.f32.mrb[0].mxu0
        %745 = vmatprep.mubr.bf16.mxu0 0
        %746 = vmatmul.mubr.bf16.gmra.mrb[0].mxu0 %v646
        %v747 = vpop.f32.mrb[0].mxu0
        %v748 = vadd.f32 %v619, %v747
        %v749 = vpop.f32.mrb[0].mxu0
        %v750 = vpop.f32.mrb[0].mxu0
        %v751 = vadd.f32 %v619, %v750
        %v752 = vpop.f32.mrb[0].mxu0
        %753 = vmatprep.mubr.bf16.mxu0 0
        %754 = vmatmul.mubr.bf16.gmra.mrb[0].mxu0 %v649
        %v755 = vpop.f32.mrb[0].mxu0
        %v756 = vadd.f32 %v619, %v755
        %v757 = vpop.f32.mrb[0].mxu0
        %v758 = vpop.f32.mrb[0].mxu0
        %v759 = vadd.f32 %v619, %v758
        %v760 = vpop.f32.mrb[0].mxu0
        %761 = vmatprep.mubr.bf16.mxu0 0
        %762 = vmatmul.mubr.bf16.gmra.mrb[0].mxu0 %v652
        %v763 = vpop.f32.mrb[0].mxu0
        %v764 = vadd.f32 %v619, %v763
        %v765 = vpop.f32.mrb[0].mxu0
        %v766 = vpop.f32.mrb[0].mxu0
        %v767 = vadd.f32 %v619, %v766
        %v768 = vpop.f32.mrb[0].mxu0
        %769 = vmatprep.mubr.bf16.mxu0 0
        %770 = vmatmul.mubr.bf16.gmra.mrb[0].mxu0 %v655
        %v771 = vpop.f32.mrb[0].mxu0
        %v772 = vadd.f32 %v619, %v771
        %v773 = vpop.f32.mrb[0].mxu0
        %v774 = vpop.f32.mrb[0].mxu0
        %v775 = vadd.f32 %v619, %v774
        %v776 = vpop.f32.mrb[0].mxu0
        %777 = vmatprep.mubr.bf16.mxu0 0
        %778 = vmatmul.mubr.bf16.gmra.mrb[0].mxu0 %v658
        %v779 = vpop.f32.mrb[0].mxu0
        %v780 = vadd.f32 %v619, %v779
        %v781 = vpop.f32.mrb[0].mxu0
        %v782 = vpop.f32.mrb[0].mxu0
        %v783 = vadd.f32 %v619, %v782
        %v784 = vpop.f32.mrb[0].mxu0
        %785 = vmatprep.mubr.bf16.mxu0 0
        %786 = vmatmul.mubr.bf16.gmra.mrb[0].mxu0 %v661
        %v787 = vpop.f32.mrb[0].mxu0
        %v788 = vadd.f32 %v619, %v787
        %v789 = vpop.f32.mrb[0].mxu0
        %v790 = vpop.f32.mrb[0].mxu0
        %v791 = vadd.f32 %v619, %v790
        %v792 = vpop.f32.mrb[0].mxu0
        %793 = vmatprep.mubr.bf16.mxu0 0
        %794 = vmatmul.mubr.bf16.gmra.mrb[0].mxu0 %v664
        %v795 = vpop.f32.mrb[0].mxu0
        %v796 = vadd.f32 %v619, %v795
        %v797 = vpop.f32.mrb[0].mxu0
        %v798 = vpop.f32.mrb[0].mxu0
        %v799 = vadd.f32 %v619, %v798
        %v800 = vpop.f32.mrb[0].mxu0
        %801 = vmatprep.mubr.bf16.mxu0 0
        %802 = vmatmul.mubr.bf16.gmra.mrb[0].mxu0 %v667
        %v803 = vpop.f32.mrb[0].mxu0
        %v804 = vadd.f32 %v619, %v803
        %v805 = vpop.f32.mrb[0].mxu0
        %v806 = vpop.f32.mrb[0].mxu0
        %v807 = vadd.f32 %v619, %v806
        %v808 = vpop.f32.mrb[0].mxu0
        %809 = vmatprep.mubr.bf16.mxu0 0
        %810 = vmatmul.mubr.bf16.gmra.mrb[0].mxu0 %v670
        %v811 = vpop.f32.mrb[0].mxu0
        %v812 = vadd.f32 %v619, %v811
        %v813 = vpop.f32.mrb[0].mxu0
        %v814 = vpop.f32.mrb[0].mxu0
        %v815 = vadd.f32 %v619, %v814
        %v816 = vpop.f32.mrb[0].mxu0
        %817 = vmatprep.mubr.bf16.mxu0 0
        %818 = vmatmul.mubr.bf16.gmra.mrb[0].mxu0 %v673
        %v819 = vpop.f32.mrb[0].mxu0
        %v820 = vadd.f32 %v619, %v819
        %v821 = vpop.f32.mrb[0].mxu0
        %v822 = vpop.f32.mrb[0].mxu0
        %v823 = vadd.f32 %v619, %v822
        %v824 = vpop.f32.mrb[0].mxu0
        %825 = vmatprep.mubr.bf16.mxu0 0
        %826 = vmatmul.mubr.bf16.gmra.mrb[0].mxu0 %v676
        %v827 = vpop.f32.mrb[0].mxu0
        %v828 = vadd.f32 %v619, %v827
        %v829 = vpop.f32.mrb[0].mxu0
        %v830 = vpop.f32.mrb[0].mxu0
        %v831 = vadd.f32 %v619, %v830
        %v832 = vpop.f32.mrb[0].mxu0
        %833 = vmatprep.mubr.bf16.mxu0 0
        %834 = vmatmul.mubr.bf16.gmra.mrb[0].mxu0 %v679
        %v835 = vpop.f32.mrb[0].mxu0
        %v836 = vadd.f32 %v619, %v835
        %v837 = vpop.f32.mrb[0].mxu0
        %v838 = vpop.f32.mrb[0].mxu0
        %v839 = vadd.f32 %v619, %v838
        %v840 = vpop.f32.mrb[0].mxu0
        %841 = vdwg.mxu0
        %v842 = vmax.f32 %v716, 0.0
        %v843 = vmax.f32 %v719, 0.0
        %v844 = vmax.f32 %v724, 0.0
        %v845 = vmax.f32 %v727, 0.0
        %v846 = vmax.f32 %v732, 0.0
        %v847 = vmax.f32 %v735, 0.0
        %v848 = vmax.f32 %v740, 0.0
        %v849 = vmax.f32 %v743, 0.0
        %v850 = vmax.f32 %v748, 0.0
        %v851 = vmax.f32 %v751, 0.0
        %v852 = vmax.f32 %v756, 0.0
        %v853 = vmax.f32 %v759, 0.0
        %v854 = vmax.f32 %v764, 0.0
        %v855 = vmax.f32 %v767, 0.0
        %v856 = vmax.f32 %v772, 0.0
        %v857 = vmax.f32 %v775, 0.0
        %v858 = vmax.f32 %v780, 0.0
        %v859 = vmax.f32 %v783, 0.0
        %v860 = vmax.f32 %v788, 0.0
        %v861 = vmax.f32 %v791, 0.0
        %v862 = vmax.f32 %v796, 0.0
        %v863 = vmax.f32 %v799, 0.0
        %v864 = vmax.f32 %v804, 0.0
        %v865 = vmax.f32 %v807, 0.0
        %v866 = vmax.f32 %v812, 0.0
        %v867 = vmax.f32 %v815, 0.0
        %v868 = vmax.f32 %v820, 0.0
        %v869 = vmax.f32 %v823, 0.0
        %v870 = vmax.f32 %v828, 0.0
        %v871 = vmax.f32 %v831, 0.0
        %v872 = vmax.f32 %v836, 0.0
        %v873 = vmax.f32 %v839, 0.0
        %v874 = vpack.c.bf16 %v843, %v842
        %v875 = vpack.c.bf16 %v845, %v844
        %v876 = vpack.c.bf16 %v847, %v846
        %v877 = vpack.c.bf16 %v849, %v848
        %v878 = vpack.c.bf16 %v851, %v850
        %v879 = vpack.c.bf16 %v853, %v852
        %v880 = vpack.c.bf16 %v855, %v854
        %v881 = vpack.c.bf16 %v857, %v856
        %v882 = vpack.c.bf16 %v859, %v858
        %v883 = vpack.c.bf16 %v861, %v860
        %v884 = vpack.c.bf16 %v863, %v862
        %v885 = vpack.c.bf16 %v865, %v864
        %v886 = vpack.c.bf16 %v867, %v866
        %v887 = vpack.c.bf16 %v869, %v868
        %v888 = vpack.c.bf16 %v871, %v870
        %v889 = vpack.c.bf16 %v873, %v872
        %v890 = vld [vmem:[%s5] sm:$0xf]
        %v891 = vld [vmem:[%s5 + $0x4] sm:$0xf]
        %v892 = vld [vmem:[%s5 + $0x8] sm:$0xf]
        %v893 = vld [vmem:[%s5 + $0xc] sm:$0xf]
        %v894 = vld [vmem:[%s6] sm:$0x1]
        %v896 = vlaneseq
        %v897 = vshrl.u32 %v896, 7
        %v898 = vsub.s32 0, %v897
        %v899 = vrot.slane %v894, %v898
        %v905 = vunpack.c.l.b16 %v890
        %v906 = vunpack.c.l.b16 %v891
        %v907 = vunpack.c.l.b16 %v892
        %v908 = vunpack.c.l.b16 %v893
        %v909 = vpack.c.b16 %v906, %v905
        %v910 = vpack.c.b16 %v908, %v907
        %v914 = vsel %vm352, %v874, 0
        %v917 = vsel %vm352, %v875, 0
        %v920 = vsel %vm352, %v876, 0
        %v923 = vsel %vm352, %v877, 0
        %v926 = vsel %vm352, %v878, 0
        %v929 = vsel %vm352, %v879, 0
        %v932 = vsel %vm352, %v880, 0
        %v935 = vsel %vm352, %v881, 0
        %v938 = vsel %vm352, %v882, 0
        %v941 = vsel %vm352, %v883, 0
        %v944 = vsel %vm352, %v884, 0
        %v947 = vsel %vm352, %v885, 0
        %v950 = vsel %vm352, %v886, 0
        %v953 = vsel %vm352, %v887, 0
        %v956 = vsel %vm352, %v888, 0
        %v959 = vsel %vm352, %v889, 0
        %961 = vmatprep.subr.bf16.mxu0 0
        %962 = vmatpush1.bf16.msra.mxu0 %v909
        %963 = vmatprep.subr.bf16.mxu0 0
        %964 = vmatpush1.bf16.msra.mxu0 %v910
        %965 = vmatprep.subr.bf16.mxu0 0
        %966 = vmatpush1.bf16.msra.mxu0 0
        %967 = vmatprep.subr.bf16.mxu0 0
        %968 = vmatpush1.bf16.msra.mxu0 0
        %969 = vmatprep.subr.bf16.mxu0 0
        %970 = vmatpush1.bf16.msra.mxu0 0
        %971 = vmatprep.subr.bf16.mxu0 0
        %972 = vmatpush1.bf16.msra.mxu0 0
        %973 = vmatprep.subr.bf16.mxu0 0
        %974 = vmatpush1.bf16.msra.mxu0 0
        %975 = vmatprep.subr.bf16.mxu0 0
        %976 = vmatpush1.bf16.msra.mxu0 0
        %977 = vmatprep.subr.bf16.mxu0 0
        %978 = vmatpush1.bf16.msra.mxu0 0
        %979 = vmatprep.subr.bf16.mxu0 0
        %980 = vmatpush1.bf16.msra.mxu0 0
        %981 = vmatprep.subr.bf16.mxu0 0
        %982 = vmatpush1.bf16.msra.mxu0 0
        %983 = vmatprep.subr.bf16.mxu0 0
        %984 = vmatpush1.bf16.msra.mxu0 0
        %985 = vmatprep.subr.bf16.mxu0 0
        %986 = vmatpush1.bf16.msra.mxu0 0
        %987 = vmatprep.subr.bf16.mxu0 0
        %988 = vmatpush1.bf16.msra.mxu0 0
        %989 = vmatprep.subr.bf16.mxu0 0
        %990 = vmatpush1.bf16.msra.mxu0 0
        %991 = vmatprep.subr.bf16.mxu0 0
        %992 = vmatpush1.bf16.msra.mxu0 0
        %993 = vmatprep.mubr.bf16.mxu0 0
        %994 = vmatmul.mubr.bf16.gmra.mrb[0].mxu0 %v914
        %v995 = vpop.f32.mrb[0].mxu0
        %v996 = vadd.f32 %v899, %v995
        %v997 = vpop.f32.mrb[0].mxu0
        %v998 = vpop.f32.mrb[0].mxu0
        %v999 = vadd.f32 %v899, %v998
        %v1000 = vpop.f32.mrb[0].mxu0
        %1001 = vmatprep.mubr.bf16.mxu0 0
        %1002 = vmatmul.mubr.bf16.gmra.mrb[0].mxu0 %v917
        %v1003 = vpop.f32.mrb[0].mxu0
        %v1004 = vadd.f32 %v899, %v1003
        %v1005 = vpop.f32.mrb[0].mxu0
        %v1006 = vpop.f32.mrb[0].mxu0
        %v1007 = vadd.f32 %v899, %v1006
        %v1008 = vpop.f32.mrb[0].mxu0
        %1009 = vmatprep.mubr.bf16.mxu0 0
        %1010 = vmatmul.mubr.bf16.gmra.mrb[0].mxu0 %v920
        %v1011 = vpop.f32.mrb[0].mxu0
        %v1012 = vadd.f32 %v899, %v1011
        %v1013 = vpop.f32.mrb[0].mxu0
        %v1014 = vpop.f32.mrb[0].mxu0
        %v1015 = vadd.f32 %v899, %v1014
        %v1016 = vpop.f32.mrb[0].mxu0
        %1017 = vmatprep.mubr.bf16.mxu0 0
        %1018 = vmatmul.mubr.bf16.gmra.mrb[0].mxu0 %v923
        %v1019 = vpop.f32.mrb[0].mxu0
        %v1020 = vadd.f32 %v899, %v1019
        %v1021 = vpop.f32.mrb[0].mxu0
        %v1022 = vpop.f32.mrb[0].mxu0
        %v1023 = vadd.f32 %v899, %v1022
        %v1024 = vpop.f32.mrb[0].mxu0
        %1025 = vmatprep.mubr.bf16.mxu0 0
        %1026 = vmatmul.mubr.bf16.gmra.mrb[0].mxu0 %v926
        %v1027 = vpop.f32.mrb[0].mxu0
        %v1028 = vadd.f32 %v899, %v1027
        %v1029 = vpop.f32.mrb[0].mxu0
        %v1030 = vpop.f32.mrb[0].mxu0
        %v1031 = vadd.f32 %v899, %v1030
        %v1032 = vpop.f32.mrb[0].mxu0
        %1033 = vmatprep.mubr.bf16.mxu0 0
        %1034 = vmatmul.mubr.bf16.gmra.mrb[0].mxu0 %v929
        %v1035 = vpop.f32.mrb[0].mxu0
        %v1036 = vadd.f32 %v899, %v1035
        %v1037 = vpop.f32.mrb[0].mxu0
        %v1038 = vpop.f32.mrb[0].mxu0
        %v1039 = vadd.f32 %v899, %v1038
        %v1040 = vpop.f32.mrb[0].mxu0
        %1041 = vmatprep.mubr.bf16.mxu0 0
        %1042 = vmatmul.mubr.bf16.gmra.mrb[0].mxu0 %v932
        %v1043 = vpop.f32.mrb[0].mxu0
        %v1044 = vadd.f32 %v899, %v1043
        %v1045 = vpop.f32.mrb[0].mxu0
        %v1046 = vpop.f32.mrb[0].mxu0
        %v1047 = vadd.f32 %v899, %v1046
        %v1048 = vpop.f32.mrb[0].mxu0
        %1049 = vmatprep.mubr.bf16.mxu0 0
        %1050 = vmatmul.mubr.bf16.gmra.mrb[0].mxu0 %v935
        %v1051 = vpop.f32.mrb[0].mxu0
        %v1052 = vadd.f32 %v899, %v1051
        %v1053 = vpop.f32.mrb[0].mxu0
        %v1054 = vpop.f32.mrb[0].mxu0
        %v1055 = vadd.f32 %v899, %v1054
        %v1056 = vpop.f32.mrb[0].mxu0
        %1057 = vmatprep.mubr.bf16.mxu0 0
        %1058 = vmatmul.mubr.bf16.gmra.mrb[0].mxu0 %v938
        %v1059 = vpop.f32.mrb[0].mxu0
        %v1060 = vadd.f32 %v899, %v1059
        %v1061 = vpop.f32.mrb[0].mxu0
        %v1062 = vpop.f32.mrb[0].mxu0
        %v1063 = vadd.f32 %v899, %v1062
        %v1064 = vpop.f32.mrb[0].mxu0
        %1065 = vmatprep.mubr.bf16.mxu0 0
        %1066 = vmatmul.mubr.bf16.gmra.mrb[0].mxu0 %v941
        %v1067 = vpop.f32.mrb[0].mxu0
        %v1068 = vadd.f32 %v899, %v1067
        %v1069 = vpop.f32.mrb[0].mxu0
        %v1070 = vpop.f32.mrb[0].mxu0
        %v1071 = vadd.f32 %v899, %v1070
        %v1072 = vpop.f32.mrb[0].mxu0
        %1073 = vmatprep.mubr.bf16.mxu0 0
        %1074 = vmatmul.mubr.bf16.gmra.mrb[0].mxu0 %v944
        %v1075 = vpop.f32.mrb[0].mxu0
        %v1076 = vadd.f32 %v899, %v1075
        %v1077 = vpop.f32.mrb[0].mxu0
        %v1078 = vpop.f32.mrb[0].mxu0
        %v1079 = vadd.f32 %v899, %v1078
        %v1080 = vpop.f32.mrb[0].mxu0
        %1081 = vmatprep.mubr.bf16.mxu0 0
        %1082 = vmatmul.mubr.bf16.gmra.mrb[0].mxu0 %v947
        %v1083 = vpop.f32.mrb[0].mxu0
        %v1084 = vadd.f32 %v899, %v1083
        %v1085 = vpop.f32.mrb[0].mxu0
        %v1086 = vpop.f32.mrb[0].mxu0
        %v1087 = vadd.f32 %v899, %v1086
        %v1088 = vpop.f32.mrb[0].mxu0
        %1089 = vmatprep.mubr.bf16.mxu0 0
        %1090 = vmatmul.mubr.bf16.gmra.mrb[0].mxu0 %v950
        %v1091 = vpop.f32.mrb[0].mxu0
        %v1092 = vadd.f32 %v899, %v1091
        %v1093 = vpop.f32.mrb[0].mxu0
        %v1094 = vpop.f32.mrb[0].mxu0
        %v1095 = vadd.f32 %v899, %v1094
        %v1096 = vpop.f32.mrb[0].mxu0
        %1097 = vmatprep.mubr.bf16.mxu0 0
        %1098 = vmatmul.mubr.bf16.gmra.mrb[0].mxu0 %v953
        %v1099 = vpop.f32.mrb[0].mxu0
        %v1100 = vadd.f32 %v899, %v1099
        %v1101 = vpop.f32.mrb[0].mxu0
        %v1102 = vpop.f32.mrb[0].mxu0
        %v1103 = vadd.f32 %v899, %v1102
        %v1104 = vpop.f32.mrb[0].mxu0
        %1105 = vmatprep.mubr.bf16.mxu0 0
        %1106 = vmatmul.mubr.bf16.gmra.mrb[0].mxu0 %v956
        %v1107 = vpop.f32.mrb[0].mxu0
        %v1108 = vadd.f32 %v899, %v1107
        %v1109 = vpop.f32.mrb[0].mxu0
        %v1110 = vpop.f32.mrb[0].mxu0
        %v1111 = vadd.f32 %v899, %v1110
        %v1112 = vpop.f32.mrb[0].mxu0
        %1113 = vmatprep.mubr.bf16.mxu0 0
        %1114 = vmatmul.mubr.bf16.gmra.mrb[0].mxu0 %v959
        %v1115 = vpop.f32.mrb[0].mxu0
        %v1116 = vadd.f32 %v899, %v1115
        %v1117 = vpop.f32.mrb[0].mxu0
        %v1118 = vpop.f32.mrb[0].mxu0
        %v1119 = vadd.f32 %v899, %v1118
        %v1120 = vpop.f32.mrb[0].mxu0
        %1121 = vdwg.mxu0
        %1122 = vst [vmem:[%s272] sm:$0xff] %v996
        %1123 = vst [vmem:[%s272 + $0x8] sm:$0xff] %v999
        %1124 = vst [vmem:[%s272 + $0x10] sm:$0xff] %v1004
        %1125 = vst [vmem:[%s272 + $0x18] sm:$0xff] %v1007
        %1126 = vst [vmem:[%s272 + $0x20] sm:$0xff] %v1012
        %1127 = vst [vmem:[%s272 + $0x28] sm:$0xff] %v1015
        %1128 = vst [vmem:[%s272 + $0x30] sm:$0xff] %v1020
        %1129 = vst [vmem:[%s272 + $0x38] sm:$0xff] %v1023
        %1130 = vst [vmem:[%s272 + $0x40] sm:$0xff] %v1028
        %1131 = vst [vmem:[%s272 + $0x48] sm:$0xff] %v1031
        %1132 = vst [vmem:[%s272 + $0x50] sm:$0xff] %v1036
        %1133 = vst [vmem:[%s272 + $0x58] sm:$0xff] %v1039
        %1134 = vst [vmem:[%s272 + $0x60] sm:$0xff] %v1044
        %1135 = vst [vmem:[%s272 + $0x68] sm:$0xff] %v1047
        %1136 = vst [vmem:[%s272 + $0x70] sm:$0xff] %v1052
        %1137 = vst [vmem:[%s272 + $0x78] sm:$0xff] %v1055
        %1138 = vst [vmem:[%s272 + $0x80] sm:$0xff] %v1060
        %1139 = vst [vmem:[%s272 + $0x88] sm:$0xff] %v1063
        %1140 = vst [vmem:[%s272 + $0x90] sm:$0xff] %v1068
        %1141 = vst [vmem:[%s272 + $0x98] sm:$0xff] %v1071
        %1142 = vst [vmem:[%s272 + $0xa0] sm:$0xff] %v1076
        %1143 = vst [vmem:[%s272 + $0xa8] sm:$0xff] %v1079
        %1144 = vst [vmem:[%s272 + $0xb0] sm:$0xff] %v1084
        %1145 = vst [vmem:[%s272 + $0xb8] sm:$0xff] %v1087
        %1146 = vst [vmem:[%s272 + $0xc0] sm:$0xff] %v1092
        %1147 = vst [vmem:[%s272 + $0xc8] sm:$0xff] %v1095
        %1148 = vst [vmem:[%s272 + $0xd0] sm:$0xff] %v1100
        %1149 = vst [vmem:[%s272 + $0xd8] sm:$0xff] %v1103
        %1150 = vst [vmem:[%s272 + $0xe0] sm:$0xff] %v1108
        %1151 = vst [vmem:[%s272 + $0xe8] sm:$0xff] %v1111
        %1152 = vst [vmem:[%s272 + $0xf0] sm:$0xff] %v1116
        %1153 = vst [vmem:[%s272 + $0xf8] sm:$0xff] %v1119
        %s1154 = sand.u32 %s181, 1
        %s1155 = scalar_lea.sflag [#allocation3], %s1154
        %s1156 = sand.u32 %s181, 1
        %s1157 = smul.addr %s1156, 256
        %s1158 = scalar_lea.vmem [#allocation2], %s1157
        // Predicated region
        $region49: #{tpu_custom_call.1} parent=47 // pred_check
          %p1159 = pneg %p191
        $region50: #{tpu_custom_call.1} parent=47 // pred_check_branch
          %1161 = sbr.rel (%p1159) target = $region52
        $region51: #{tpu_custom_call.1} parent=47 // pred_region
          %s1162 = smul.u32 32, %s21
          %s1164 = ssub.s32 4096, 4096
          %1165 = vsyncadd %s1155, %s1164
          %s1166 = smul.addr %s1162, 128
          %s1167 = scalar_lea.hbm %s7, %s1166
          %s1168 = sshll.u32 %s1158, 4
          %s1169 = int_to_ptr.vmem [resolvable:$true] %s1168
          %1174 = dma.vmem_to_hbm [thread:$0]  %s1169, 4096, %s1167, %s1155, 128, 128, 8
        $region52: #{tpu_custom_call.1} parent=47 // pred_fallthru
          _
      $region48: #{tpu_custom_call.1} parent=5 // pred_fallthru
        _
      %p1175 = scmp.le.s32.totalorder 2, %s16
      // Predicated region
      $region53: #{tpu_custom_call.1} parent=5 // pred_check
        %p1176 = pneg %p1175
      $region54: #{tpu_custom_call.1} parent=5 // pred_check_branch
        %1178 = sbr.rel (%p1176) target = $region56
      $region55: #{tpu_custom_call.1} parent=5 // pred_region
        %s1179 = ssub.s32 %s16, 2
        // Predicated region
        $region57: #{tpu_custom_call.1} parent=55 // pred_check
          %p1180 = pneg %p197
        $region58: #{tpu_custom_call.1} parent=55 // pred_check_branch
          %1182 = sbr.rel (%p1180) target = $region60
        $region59: #{tpu_custom_call.1} parent=55 // pred_region
          %s1183 = sand.u32 %s182, 1
          %s1184 = scalar_lea.sflag [#allocation3], %s1183
          %s1185 = sand.u32 %s182, 1
          %s1186 = smul.addr %s1185, 256
          %s1187 = scalar_lea.vmem [#allocation2], %s1186
          %1188 = dma.done %s1184, 4096
        $region60: #{tpu_custom_call.1} parent=55 // pred_fallthru
          _
      $region56: #{tpu_custom_call.1} parent=5 // pred_fallthru
        _
    $region6: #{tpu_custom_call.1} parent=1 // loop_footer
      %s20 = sadd.s32 1, %s16
    $region7: #{tpu_custom_call.1} parent=1 // loop_footer_branch
      %15 = sbr.rel target = $region3
    $region8: #{tpu_custom_call.1} parent=1 // loop_exit
      _
    %1189 = vsyncpa [#allocation3], 1
    %s1190 = scalar_lea.sflag [#allocation3], 1
    %1191 = vsyncpa %s1190, 1

</llo_original>
